<compile_context>
chip_gen: v5e
topology: v5e:2x2
jax: 0.10.0
libtpu: 0.0.40
codegen_flags: <defaults>
</compile_context>

<pallas_src>
import functools

import jax
import jax.numpy as jnp
from jax import lax
from jax.experimental import pallas as pl
from jax.experimental.pallas import tpu as pltpu

_LANE = 128
_MAX_BB = 8          # images packed per grid step


def _fused_kernel(patches_ref, wc_ref, w_ref, b_ref, out_ref, *, bb, hw):
    # patches_ref: [K1, BB*HW]  BB images packed on lanes; ones row folds bias
    # wc_ref:      [F, K1]      conv weight, conv bias appended as last column
    # w_ref:       [F, L]       folded head weight (w1@w2@w3@w4)/HW, 0-padded
    # b_ref:       [1, L]       folded head bias, 0-padded
    # out_ref:     [BB, L]
    conv = jnp.dot(wc_ref[...], patches_ref[...],
                   preferred_element_type=jnp.float32)        # [F, BB*HW] MXU
    conv = jnp.maximum(conv, 0.0)                             # ReLU (VPU)
    w = w_ref[...]                                            # hoisted loads
    bias = b_ref[...]
    for i in range(bb):                                       # static unroll
        # Per-image global-average-pool (sum; 1/HW folded into w): static,
        # 128-aligned lane-slice + lane-axis reduce.
        feats = jnp.sum(conv[:, i * hw:(i + 1) * hw], axis=1, keepdims=True)
        # Folded head: broadcast multiply + sublane reduce (F x L, tiny).
        row = jnp.sum(feats * w, axis=0, keepdims=True) + bias    # [1, L]
        out_ref[pl.ds(i, 1), :] = row


def _im2col_nchw(img, kh=3, kw=3):
    """img: [B, C, H, W] -> patches [B, C*kh*kw, H*W] (SAME padding, stride 1)."""
    b, c, h, w = img.shape
    patches = lax.conv_general_dilated_patches(
        img, filter_shape=(kh, kw), window_strides=(1, 1), padding="SAME")
    return patches.reshape(b, c * kh * kw, h * w)                 # [B, K, HW]


@jax.jit
def no_use_meta_forward(img, params):
    b_sz, _, h, w = img.shape
    hw = h * w
    fc_dim = params["w4"].shape[1]
    n_lane = max(_LANE, ((fc_dim + _LANE - 1) // _LANE) * _LANE)

    patches = _im2col_nchw(img)                                   # [B, K, HW]
    k = patches.shape[1]
    # Fold conv bias: append a ones row to patches, bias column to the weight.
    patches_aug = jnp.concatenate(
        [patches, jnp.ones((b_sz, 1, hw), jnp.float32)], axis=1)  # [B, K+1, HW]
    k1 = k + 1
    wc_fk = params["wc"].T                                        # [F, K]
    wc_aug = jnp.concatenate([wc_fk, params["bc"].T], axis=1)     # [F, K+1]
    feat_dim = wc_aug.shape[0]

    # Exact fold of the activation-free head plus the 1/HW GAP scale.
    w_eff = params["w1"] @ params["w2"] @ params["w3"] @ params["w4"]      # [F, fc]
    b_eff = ((params["b1"] @ params["w2"] + params["b2"]) @ params["w3"]
             + params["b3"]) @ params["w4"] + params["b4"]                 # [1, fc]
    w_eff = w_eff / float(hw)

    # Lane-dense padded head weight / bias; sliced back after the kernel.
    w_pad = jnp.zeros((feat_dim, n_lane), jnp.float32).at[:, :fc_dim].set(w_eff)
    b_pad = jnp.zeros((1, n_lane), jnp.float32).at[:, :fc_dim].set(b_eff)

    # Pack images along the lane axis: [K1, B_pad*HW].
    bb = min(b_sz, _MAX_BB)
    b_pad_sz = ((b_sz + bb - 1) // bb) * bb
    patches_t = jnp.transpose(patches_aug, (1, 0, 2))             # [K1, B, HW]
    if b_pad_sz != b_sz:
        patches_t = jnp.pad(patches_t,
                            ((0, 0), (0, b_pad_sz - b_sz), (0, 0)))
    patches_flat = patches_t.reshape(k1, b_pad_sz * hw)           # [K1, Bp*HW]

    kernel = functools.partial(_fused_kernel, bb=bb, hw=hw)
    out = pl.pallas_call(
        kernel,
        out_shape=jax.ShapeDtypeStruct((b_pad_sz, n_lane), jnp.float32),
        grid_spec=pltpu.PrefetchScalarGridSpec(
            num_scalar_prefetch=0,
            grid=(b_pad_sz // bb,),
            in_specs=[
                pl.BlockSpec((k1, bb * hw), lambda i: (0, i)),        # patches
                pl.BlockSpec((feat_dim, k1), lambda i: (0, 0)),       # conv w+b
                pl.BlockSpec((feat_dim, n_lane), lambda i: (0, 0)),   # folded W
                pl.BlockSpec((1, n_lane), lambda i: (0, 0)),          # folded b
            ],
            out_specs=pl.BlockSpec((bb, n_lane), lambda i: (i, 0)),
        ),
        compiler_params=pltpu.CompilerParams(
            dimension_semantics=("parallel",),
            vmem_limit_bytes=32 * 1024 * 1024),
    )(patches_flat, wc_aug, w_pad, b_pad)

    return out[:b_sz, :fc_dim]


def _xavier_normal(key, fan_in, fan_out):
    std = (2.0 / (fan_in + fan_out)) ** 0.5
    # PyTorch weight is [out, in]; we store the transpose [in, out].
    return std * jax.random.normal(key, (fan_in, fan_out), dtype=jnp.float32)


def init_params(key, in_channels=3, feat_dim=32, fc_dim=1):
    kh = kw = 3
    k_conv = in_channels * kh * kw
    keys = jax.random.split(key, 6)
    return {
        # synthetic backbone stem
        "wc": 0.1 * jax.random.normal(keys[0], (k_conv, feat_dim), jnp.float32),
        "bc": jnp.zeros((1, feat_dim), jnp.float32),
        # dense1 (LazyLinear, in_features inferred = feat_dim)
        "w1": (1.0 / (feat_dim ** 0.5)) *
              jax.random.normal(keys[1], (feat_dim, 128), jnp.float32),
        "b1": jnp.zeros((1, 128), jnp.float32),
        # dense2/3/4: xavier_normal_ weights, zero biases (as in __init__)
        "w2": _xavier_normal(keys[2], 128, 64),
        "b2": jnp.zeros((1, 64), jnp.float32),
        "w3": _xavier_normal(keys[3], 64, 32),
        "b3": jnp.zeros((1, 32), jnp.float32),
        "w4": _xavier_normal(keys[4], 32, fc_dim),
        "b4": jnp.zeros((1, fc_dim), jnp.float32),
    }


def _reference_forward(img, params):
    patches = _im2col_nchw(img)                                   # [B, K, HW]
    conv = jnp.einsum("kf,bkp->bpf", params["wc"], patches) + params["bc"]
    conv = jnp.maximum(conv, 0.0)
    feats = jnp.mean(conv, axis=1)                                # [B, F]
    h = feats @ params["w1"] + params["b1"]
    h = h @ params["w2"] + params["b2"]
    h = h @ params["w3"] + params["b3"]
    return h @ params["w4"] + params["b4"]


if __name__ == "__main__":
    key = jax.random.PRNGKey(0)
    k_img, k_params = jax.random.split(key)

    B, C, H, W = 2, 3, 16, 16
    img = jax.random.normal(k_img, (B, C, H, W), dtype=jnp.float32)
    params = init_params(k_params, in_channels=C, feat_dim=32, fc_dim=1)

    out = jax.block_until_ready(no_use_meta_forward(img, params))
    ref = jax.block_until_ready(_reference_forward(img, params))

    assert out.shape == (B, 1)
    assert jnp.allclose(out, ref, atol=1e-4, rtol=1e-4)

    print("KERNEL_OK")
</pallas_src>

<mosaic_0001>
module attributes {stable_mosaic.version = 11 : i64} {
  func.func @_fused_kernel(%arg0: i32, %arg1: memref<28x512xf32, #tpu.memory_space<vmem>>, %arg2: memref<32x28xf32, #tpu.memory_space<vmem>>, %arg3: memref<32x128xf32, #tpu.memory_space<vmem>>, %arg4: memref<1x128xf32, #tpu.memory_space<vmem>>, %arg5: memref<2x128xf32, #tpu.memory_space<vmem>>) attributes {dimension_semantics = [#tpu.dimension_semantics<parallel>], iteration_bounds = array<i64: 1>, scalar_prefetch = 0 : i64, scratch_operands = 0 : i64, tpu.core_type = #tpu.core_type<tc>, window_params = [{transform_indices = @transform_0, window_bounds = array<i64: 28, 512>}, {pipeline_mode = #tpu.pipeline_mode<synchronous>, transform_indices = @transform_1, window_bounds = array<i64: 32, 28>}, {pipeline_mode = #tpu.pipeline_mode<synchronous>, transform_indices = @transform_2, window_bounds = array<i64: 32, 128>}, {pipeline_mode = #tpu.pipeline_mode<synchronous>, transform_indices = @transform_3, window_bounds = array<i64: 1, 128>}, {transform_indices = @transform_4, window_bounds = array<i64: 2, 128>}]} {
    %c0 = arith.constant 0 : index
    %c0_0 = arith.constant 0 : index
    %0 = vector.load %arg2[%c0, %c0_0] : memref<32x28xf32, #tpu.memory_space<vmem>>, vector<32x28xf32>
    %c0_1 = arith.constant 0 : index
    %c0_2 = arith.constant 0 : index
    %1 = vector.load %arg1[%c0_1, %c0_2] : memref<28x512xf32, #tpu.memory_space<vmem>>, vector<28x512xf32>
    %cst = arith.constant dense<0.000000e+00> : vector<32x512xf32>
    %2 = tpu.matmul %0, %1, %cst {dimension_numbers = #tpu.dot_dimension_numbers<[1], [0], [0], [1], [0, 0, 1, 1], [], []>} : vector<32x28xf32>, vector<28x512xf32>, vector<32x512xf32> -> vector<32x512xf32>
    %cst_3 = arith.constant 0.000000e+00 : f32
    %3 = vector.broadcast %cst_3 : f32 to vector<32x512xf32>
    %4 = arith.maximumf %2, %3 : vector<32x512xf32>
    %c0_4 = arith.constant 0 : index
    %c0_5 = arith.constant 0 : index
    %5 = vector.load %arg3[%c0_4, %c0_5] : memref<32x128xf32, #tpu.memory_space<vmem>>, vector<32x128xf32>
    %c0_6 = arith.constant 0 : index
    %c0_7 = arith.constant 0 : index
    %6 = vector.load %arg4[%c0_6, %c0_7] : memref<1x128xf32, #tpu.memory_space<vmem>>, vector<1x128xf32>
    %7 = vector.extract_strided_slice %4 {offsets = [0, 0], sizes = [32, 256], strides = [1, 1]} : vector<32x512xf32> to vector<32x256xf32>
    %cst_8 = arith.constant dense<0.000000e+00> : vector<32xf32>
    %8 = vector.multi_reduction <add>, %7, %cst_8 [1] : vector<32x256xf32> to vector<32xf32>
    %9 = vector.shape_cast %8 : vector<32xf32> to vector<32x1xf32>
    %10 = vector.broadcast %9 : vector<32x1xf32> to vector<32x128xf32>
    %11 = arith.mulf %10, %5 : vector<32x128xf32>
    %cst_9 = arith.constant dense<0.000000e+00> : vector<128xf32>
    %12 = vector.multi_reduction <add>, %11, %cst_9 [0] : vector<32x128xf32> to vector<128xf32>
    %13 = vector.shape_cast %12 : vector<128xf32> to vector<1x128xf32>
    %14 = arith.addf %13, %6 : vector<1x128xf32>
    %c0_10 = arith.constant 0 : index
    %c0_11 = arith.constant 0 : index
    %15 = vector.load %arg5[%c0_10, %c0_11] : memref<2x128xf32, #tpu.memory_space<vmem>>, vector<1x128xf32>
    tpu.vector_store %arg5[%c0_10, %c0_11], %14 {strides = array<i32>} : memref<2x128xf32, #tpu.memory_space<vmem>>, vector<1x128xf32>,
    %16 = vector.extract_strided_slice %4 {offsets = [0, 256], sizes = [32, 256], strides = [1, 1]} : vector<32x512xf32> to vector<32x256xf32>
    %cst_12 = arith.constant dense<0.000000e+00> : vector<32xf32>
    %17 = vector.multi_reduction <add>, %16, %cst_12 [1] : vector<32x256xf32> to vector<32xf32>
    %18 = vector.shape_cast %17 : vector<32xf32> to vector<32x1xf32>
    %19 = vector.broadcast %18 : vector<32x1xf32> to vector<32x128xf32>
    %20 = arith.mulf %19, %5 : vector<32x128xf32>
    %cst_13 = arith.constant dense<0.000000e+00> : vector<128xf32>
    %21 = vector.multi_reduction <add>, %20, %cst_13 [0] : vector<32x128xf32> to vector<128xf32>
    %22 = vector.shape_cast %21 : vector<128xf32> to vector<1x128xf32>
    %23 = arith.addf %22, %6 : vector<1x128xf32>
    %c1 = arith.constant 1 : index
    %c0_14 = arith.constant 0 : index
    %24 = vector.load %arg5[%c1, %c0_14] : memref<2x128xf32, #tpu.memory_space<vmem>>, vector<1x128xf32>
    tpu.vector_store %arg5[%c1, %c0_14], %23 {strides = array<i32>} : memref<2x128xf32, #tpu.memory_space<vmem>>, vector<1x128xf32>,
    return
  }
  func.func @transform_0(%arg0: i32) -> (i32, i32) {
    %c0_i32 = arith.constant 0 : i32
    %c0_i32_0 = arith.constant 0 : i32
    return %c0_i32, %arg0 : i32, i32
  }
  func.func @transform_1(%arg0: i32) -> (i32, i32) {
    %c0_i32 = arith.constant 0 : i32
    %c0_i32_0 = arith.constant 0 : i32
    %c0_i32_1 = arith.constant 0 : i32
    return %c0_i32, %c0_i32_0 : i32, i32
  }
  func.func @transform_2(%arg0: i32) -> (i32, i32) {
    %c0_i32 = arith.constant 0 : i32
    %c0_i32_0 = arith.constant 0 : i32
    %c0_i32_1 = arith.constant 0 : i32
    return %c0_i32, %c0_i32_0 : i32, i32
  }
  func.func @transform_3(%arg0: i32) -> (i32, i32) {
    %c0_i32 = arith.constant 0 : i32
    %c0_i32_0 = arith.constant 0 : i32
    %c0_i32_1 = arith.constant 0 : i32
    return %c0_i32, %c0_i32_0 : i32, i32
  }
  func.func @transform_4(%arg0: i32) -> (i32, i32) {
    %c0_i32 = arith.constant 0 : i32
    %c0_i32_0 = arith.constant 0 : i32
    return %arg0, %c0_i32 : i32, i32
  }
}

</mosaic_0001>

<llo_original>
// kernel: no_use_meta_forward.1
$region0: #{no_use_meta_forward.1}
  #allocation0 [shape = 'u32[]', space=smem, size = 0x4, offset = 0x4, fixed_abs, tag = 'smem constant byte address 0x4 - core index']
  #allocation1 [shape = 'u32[72,128]{1,0:T(1,128)}', space=vmem, size = 0x9000, scoped, tag = 'internal scratch']
  %s0 = inlined_call_operand.vmem [shape: f32[28,512], index: 0, kind: input, shape index: {}]
  %s1 = inlined_call_operand.vmem [shape: f32[32,28], index: 1, kind: input, shape index: {}]
  %s2 = inlined_call_operand.vmem [shape: f32[32,128], index: 2, kind: input, shape index: {}]
  %s3 = inlined_call_operand.vmem [shape: f32[1,128], index: 3, kind: input, shape index: {}]
  %s4 = inlined_call_operand.vmem [shape: f32[2,128], index: 4, kind: output, shape index: {}]
  %s5 = sld [smem:[#allocation0]]
  $region26: #{no_use_meta_forward.1} parent=0
    _
  %s7 = ssub.s32 1, %s5
  %s8 = scalar_select 0, %s7, %s5
  // Predicated region
  $region2: #{no_use_meta_forward.1} parent=0 // pred_check
    _
  $region3: #{no_use_meta_forward.1} parent=0 // pred_check_branch
    %10 = sbr.rel (0) target = $region5
  $region4: #{no_use_meta_forward.1} parent=0 // pred_region
    _
  $region5: #{no_use_meta_forward.1} parent=0 // pred_fallthru
    _
  // Predicated region
  $region6: #{no_use_meta_forward.1} parent=0 // pred_check
    _
  $region7: #{no_use_meta_forward.1} parent=0 // pred_check_branch
    %12 = sbr.rel (0) target = $region9
  $region8: #{no_use_meta_forward.1} parent=0 // pred_region
    _
  $region9: #{no_use_meta_forward.1} parent=0 // pred_fallthru
    _
  // Predicated region
  $region10: #{no_use_meta_forward.1} parent=0 // pred_check
    _
  $region11: #{no_use_meta_forward.1} parent=0 // pred_check_branch
    %14 = sbr.rel (0) target = $region13
  $region12: #{no_use_meta_forward.1} parent=0 // pred_region
    _
  $region13: #{no_use_meta_forward.1} parent=0 // pred_fallthru
    _
  // Predicated region
  $region14: #{no_use_meta_forward.1} parent=0 // pred_check
    _
  $region15: #{no_use_meta_forward.1} parent=0 // pred_check_branch
    %16 = sbr.rel (0) target = $region17
  $region16: #{no_use_meta_forward.1} parent=0 // pred_region
    _
  $region17: #{no_use_meta_forward.1} parent=0 // pred_fallthru
    _
  %v17 = vld [vmem:[%s1] sm:$0xff]
  %v18 = vld [vmem:[%s1 + $0x8] sm:$0xff]
  %v19 = vld [vmem:[%s1 + $0x10] sm:$0xff]
  %v20 = vld [vmem:[%s1 + $0x18] sm:$0xff]
  %v21 = vld [vmem:[%s0] sm:$0xff]
  %v22 = vld [vmem:[%s0 + $0x8] sm:$0xff]
  %v23 = vld [vmem:[%s0 + $0x10] sm:$0xff]
  %v24 = vld [vmem:[%s0 + $0x18] sm:$0xff]
  %v25 = vld [vmem:[%s0 + $0x20] sm:$0xff]
  %v26 = vld [vmem:[%s0 + $0x28] sm:$0xff]
  %v27 = vld [vmem:[%s0 + $0x30] sm:$0xff]
  %v28 = vld [vmem:[%s0 + $0x38] sm:$0xff]
  %v29 = vld [vmem:[%s0 + $0x40] sm:$0xff]
  %v30 = vld [vmem:[%s0 + $0x48] sm:$0xff]
  %v31 = vld [vmem:[%s0 + $0x50] sm:$0xff]
  %v32 = vld [vmem:[%s0 + $0x58] sm:$0xff]
  %v33 = vld [vmem:[%s0 + $0x60] sm:$0xf]
  %v34 = vld [vmem:[%s0 + $0x68] sm:$0xf]
  %v35 = vld [vmem:[%s0 + $0x70] sm:$0xf]
  %v36 = vld [vmem:[%s0 + $0x78] sm:$0xf]
  %vm37 = vcmask 228352
  %v39 = vsel %vm37, %v17, 0
  %v42 = vsel %vm37, %v18, 0
  %v45 = vsel %vm37, %v19, 0
  %v48 = vsel %vm37, %v20, 0
  %vm50 = vcmask 1043456
  %v52 = vsel %vm50, %v33, 0
  %v55 = vsel %vm50, %v34, 0
  %v58 = vsel %vm50, %v35, 0
  %v61 = vsel %vm50, %v36, 0
  %63 = vmatpush.msra.mxu0 0.0
  %64 = vmatpush.msra.mxu0 0.0
  %65 = vmatpush.msra.mxu0 0.0
  %66 = vmatpush.msra.mxu0 0.0
  %67 = vmatpush.msra.mxu0 0.0
  %68 = vmatpush.msra.mxu0 0.0
  %69 = vmatpush.msra.mxu0 0.0
  %70 = vmatpush.msra.mxu0 0.0
  %71 = vmatpush.msra.mxu0 0.0
  %72 = vmatpush.msra.mxu0 0.0
  %73 = vmatpush.msra.mxu0 0.0
  %74 = vmatpush.msra.mxu0 0.0
  %75 = vmatpush.msra.mxu0 %v52
  %76 = vmatpush.msra.mxu0 %v29
  %77 = vmatpush.msra.mxu0 %v25
  %78 = vmatpush.msra.mxu0 %v21
  %79 = vmatmul.f32.gmra.mxu0 %v39
  %v80 = vpop.f32.mrf.mxu0
  %v81 = vadd.f32 0.0, %v80
  %82 = vmatmul.f32.gmra.mxu0 %v42
  %v83 = vpop.f32.mrf.mxu0
  %v84 = vadd.f32 0.0, %v83
  %85 = vmatmul.f32.gmra.mxu0 %v45
  %v86 = vpop.f32.mrf.mxu0
  %v87 = vadd.f32 0.0, %v86
  %88 = vmatmul.f32.gmra.mxu0 %v48
  %v89 = vpop.f32.mrf.mxu0
  %v90 = vadd.f32 0.0, %v89
  %91 = vdwg.mxu0
  %92 = vmatpush.msra.mxu0 0.0
  %93 = vmatpush.msra.mxu0 0.0
  %94 = vmatpush.msra.mxu0 0.0
  %95 = vmatpush.msra.mxu0 0.0
  %96 = vmatpush.msra.mxu0 0.0
  %97 = vmatpush.msra.mxu0 0.0
  %98 = vmatpush.msra.mxu0 0.0
  %99 = vmatpush.msra.mxu0 0.0
  %100 = vmatpush.msra.mxu0 0.0
  %101 = vmatpush.msra.mxu0 0.0
  %102 = vmatpush.msra.mxu0 0.0
  %103 = vmatpush.msra.mxu0 0.0
  %104 = vmatpush.msra.mxu0 %v55
  %105 = vmatpush.msra.mxu0 %v30
  %106 = vmatpush.msra.mxu0 %v26
  %107 = vmatpush.msra.mxu0 %v22
  %108 = vmatmul.f32.gmra.mxu0 %v39
  %v109 = vpop.f32.mrf.mxu0
  %v110 = vadd.f32 0.0, %v109
  %111 = vmatmul.f32.gmra.mxu0 %v42
  %v112 = vpop.f32.mrf.mxu0
  %v113 = vadd.f32 0.0, %v112
  %114 = vmatmul.f32.gmra.mxu0 %v45
  %v115 = vpop.f32.mrf.mxu0
  %v116 = vadd.f32 0.0, %v115
  %117 = vmatmul.f32.gmra.mxu0 %v48
  %v118 = vpop.f32.mrf.mxu0
  %v119 = vadd.f32 0.0, %v118
  %120 = vdwg.mxu0
  %121 = vmatpush.msra.mxu0 0.0
  %122 = vmatpush.msra.mxu0 0.0
  %123 = vmatpush.msra.mxu0 0.0
  %124 = vmatpush.msra.mxu0 0.0
  %125 = vmatpush.msra.mxu0 0.0
  %126 = vmatpush.msra.mxu0 0.0
  %127 = vmatpush.msra.mxu0 0.0
  %128 = vmatpush.msra.mxu0 0.0
  %129 = vmatpush.msra.mxu0 0.0
  %130 = vmatpush.msra.mxu0 0.0
  %131 = vmatpush.msra.mxu0 0.0
  %132 = vmatpush.msra.mxu0 0.0
  %133 = vmatpush.msra.mxu0 %v58
  %134 = vmatpush.msra.mxu0 %v31
  %135 = vmatpush.msra.mxu0 %v27
  %136 = vmatpush.msra.mxu0 %v23
  %137 = vmatmul.f32.gmra.mxu0 %v39
  %v138 = vpop.f32.mrf.mxu0
  %v139 = vadd.f32 0.0, %v138
  %140 = vmatmul.f32.gmra.mxu0 %v42
  %v141 = vpop.f32.mrf.mxu0
  %v142 = vadd.f32 0.0, %v141
  %143 = vmatmul.f32.gmra.mxu0 %v45
  %v144 = vpop.f32.mrf.mxu0
  %v145 = vadd.f32 0.0, %v144
  %146 = vmatmul.f32.gmra.mxu0 %v48
  %v147 = vpop.f32.mrf.mxu0
  %v148 = vadd.f32 0.0, %v147
  %149 = vdwg.mxu0
  %150 = vmatpush.msra.mxu0 0.0
  %151 = vmatpush.msra.mxu0 0.0
  %152 = vmatpush.msra.mxu0 0.0
  %153 = vmatpush.msra.mxu0 0.0
  %154 = vmatpush.msra.mxu0 0.0
  %155 = vmatpush.msra.mxu0 0.0
  %156 = vmatpush.msra.mxu0 0.0
  %157 = vmatpush.msra.mxu0 0.0
  %158 = vmatpush.msra.mxu0 0.0
  %159 = vmatpush.msra.mxu0 0.0
  %160 = vmatpush.msra.mxu0 0.0
  %161 = vmatpush.msra.mxu0 0.0
  %162 = vmatpush.msra.mxu0 %v61
  %163 = vmatpush.msra.mxu0 %v32
  %164 = vmatpush.msra.mxu0 %v28
  %165 = vmatpush.msra.mxu0 %v24
  %166 = vmatmul.f32.gmra.mxu0 %v39
  %v167 = vpop.f32.mrf.mxu0
  %v168 = vadd.f32 0.0, %v167
  %169 = vmatmul.f32.gmra.mxu0 %v42
  %v170 = vpop.f32.mrf.mxu0
  %v171 = vadd.f32 0.0, %v170
  %172 = vmatmul.f32.gmra.mxu0 %v45
  %v173 = vpop.f32.mrf.mxu0
  %v174 = vadd.f32 0.0, %v173
  %175 = vmatmul.f32.gmra.mxu0 %v48
  %v176 = vpop.f32.mrf.mxu0
  %v177 = vadd.f32 0.0, %v176
  %178 = vdwg.mxu0
  %v179 = vmax.f32 %v81, 0.0
  %v180 = vmax.f32 %v110, 0.0
  %v181 = vmax.f32 %v139, 0.0
  %v182 = vmax.f32 %v168, 0.0
  %v183 = vmax.f32 %v84, 0.0
  %v184 = vmax.f32 %v113, 0.0
  %v185 = vmax.f32 %v142, 0.0
  %v186 = vmax.f32 %v171, 0.0
  %v187 = vmax.f32 %v87, 0.0
  %v188 = vmax.f32 %v116, 0.0
  %v189 = vmax.f32 %v145, 0.0
  %v190 = vmax.f32 %v174, 0.0
  %v191 = vmax.f32 %v90, 0.0
  %v192 = vmax.f32 %v119, 0.0
  %v193 = vmax.f32 %v148, 0.0
  %v194 = vmax.f32 %v177, 0.0
  %v195 = vld [vmem:[%s2] sm:$0xff]
  %v196 = vld [vmem:[%s2 + $0x8] sm:$0xff]
  %v197 = vld [vmem:[%s2 + $0x10] sm:$0xff]
  %v198 = vld [vmem:[%s2 + $0x18] sm:$0xff]
  %v199 = vld [vmem:[%s3] sm:$0x1]
  %v200 = vadd.f32 %v179, %v180
  %201 = vadd.xlane.f32.xlu0 %v200
  %v202 = vpop.xlane.xlu0 %201
  %v203 = vadd.f32 %v183, %v184
  %204 = vadd.xlane.f32.xlu0 %v203
  %v205 = vpop.xlane.xlu0 %204
  %v206 = vadd.f32 %v187, %v188
  %207 = vadd.xlane.f32.xlu0 %v206
  %v208 = vpop.xlane.xlu0 %207
  %v209 = vadd.f32 %v191, %v192
  %210 = vadd.xlane.f32.xlu0 %v209
  %v211 = vpop.xlane.xlu0 %210
  %v212 = vmul.f32 %v202, %v195
  %v213 = vmul.f32 %v205, %v196
  %v214 = vmul.f32 %v208, %v197
  %v215 = vmul.f32 %v211, %v198
  %v216 = vadd.f32 %v212, %v213
  %v217 = vadd.f32 %v216, %v214
  %v218 = vadd.f32 %v217, %v215
  %v219 = vrot.slane %v218, 4
  %v220 = vadd.f32 %v218, %v219
  %v221 = vrot.slane %v220, 2
  %v222 = vadd.f32 %v220, %v221
  %v223 = vrot.slane %v222, 1
  %v224 = vadd.f32 %v222, %v223
  %v225 = vadd.f32 %v224, %v199
  %226 = vst [vmem:[%s4] sm:$0x1] %v225
  %v227 = vadd.f32 %v181, %v182
  %228 = vadd.xlane.f32.xlu0 %v227
  %v229 = vpop.xlane.xlu0 %228
  %v230 = vadd.f32 %v185, %v186
  %231 = vadd.xlane.f32.xlu0 %v230
  %v232 = vpop.xlane.xlu0 %231
  %v233 = vadd.f32 %v189, %v190
  %234 = vadd.xlane.f32.xlu0 %v233
  %v235 = vpop.xlane.xlu0 %234
  %v236 = vadd.f32 %v193, %v194
  %237 = vadd.xlane.f32.xlu0 %v236
  %v238 = vpop.xlane.xlu0 %237
  %v239 = vmul.f32 %v229, %v195
  %v240 = vmul.f32 %v232, %v196
  %v241 = vmul.f32 %v235, %v197
  %v242 = vmul.f32 %v238, %v198
  %v243 = vadd.f32 %v239, %v240
  %v244 = vadd.f32 %v243, %v241
  %v245 = vadd.f32 %v244, %v242
  %v246 = vrot.slane %v245, 4
  %v247 = vadd.f32 %v245, %v246
  %v248 = vrot.slane %v247, 2
  %v249 = vadd.f32 %v247, %v248
  %v250 = vrot.slane %v249, 1
  %v251 = vadd.f32 %v249, %v250
  %v252 = vadd.f32 %v251, %v199
  %253 = vst [vmem:[%s4 + $0x1] sm:$0x1] %v252
  // Predicated region
  $region18: #{no_use_meta_forward.1} parent=0 // pred_check
    _
  $region19: #{no_use_meta_forward.1} parent=0 // pred_check_branch
    %255 = sbr.rel (0) target = $region21
  $region20: #{no_use_meta_forward.1} parent=0 // pred_region
    _
  $region21: #{no_use_meta_forward.1} parent=0 // pred_fallthru
    _
  // Predicated region
  $region22: #{no_use_meta_forward.1} parent=0 // pred_check
    _
  $region23: #{no_use_meta_forward.1} parent=0 // pred_check_branch
    %257 = sbr.rel (0) target = $region25
  $region24: #{no_use_meta_forward.1} parent=0 // pred_region
    _
  $region25: #{no_use_meta_forward.1} parent=0 // pred_fallthru
    _

</llo_original>
